<compile_context>
chip_gen: v5e
topology: v5e:2x2
jax: 0.10.0
libtpu: 0.0.40
codegen_flags: <defaults>
</compile_context>

<pallas_src>
import functools
import math

import jax
import jax.numpy as jnp
from jax.experimental import pallas as pl
from jax.experimental.pallas import tpu as pltpu


def _cdiv(a, b):
    return -(-a // b)


def _round_up(x, m):
    return ((x + m - 1) // m) * m


def _vmem_params():
    """Per-generation VMEM capacity and a safe scoped limit."""
    vmem_bytes = 64 * 1024 * 1024            # conservative default (v7x per-TC)
    try:
        info = pltpu.get_tpu_info()
        cap = getattr(info, "vmem_capacity_bytes", None)
        if cap:
            vmem_bytes = int(cap)
    except Exception:
        pass
    # v5e/v6e (128 MiB) -> 96 MiB limit; v7x (64 MiB/TC) -> 48 MiB limit.
    vmem_limit = min(vmem_bytes * 3 // 4, 100 * 1024 * 1024)
    return vmem_bytes, vmem_limit


def _choose_tile_rows(num_rows, packed_width, io_itemsize, sublane, vmem_bytes):
    """Row-tile size from a VMEM budget that includes in-kernel temporaries."""
    # Live working set per packed row:
    #   (1 input + 2 output) blocks, double-buffered, in the I/O dtype
    #   + ~5 full-width float32 temporaries inside the kernel body.
    bytes_per_row = packed_width * (6 * io_itemsize + 5 * 4)
    budget = vmem_bytes // 2                 # leave half of VMEM as headroom
    rows = max(sublane, (budget // max(1, bytes_per_row)) // sublane * sublane)
    rows = min(rows, _round_up(num_rows, sublane))
    steps = _cdiv(num_rows, rows)
    # v7x megacore: for small grids force an EVEN step count so both
    # TensorCores get equal shares of the ("parallel",) axis (also balances
    # block sizes when the step count is already even).
    if steps < 16 and num_rows > sublane:
        even_steps = steps + (steps & 1)
        rows = max(sublane, _round_up(_cdiv(num_rows, even_steps), sublane))
    return rows


def _threshold_attention_kernel(thr_ref, x_ref, *rest, training, seg_count,
                                mxu_precision):
    """One (tile_rows, W) tile: mask -> threshold -> row/segment normalize."""
    if seg_count > 1:
        segmat_ref, norm_ref, mask_ref = rest
    else:
        norm_ref, mask_ref = rest

    x = x_ref[...].astype(jnp.float32)       # compute in f32
    t = thr_ref[0]                           # f32 scalar from SMEM

    if training:
        # soft (differentiable) mask: sigmoid(20 * (x - threshold))
        mask = jax.nn.sigmoid(20.0 * (x - t))
        thresholded = x * mask
        mask_ref[...] = mask.astype(mask_ref.dtype)
    else:
        # hard mask: (x > threshold); cast directly into the output dtype and
        # build `thresholded` via select -- no separate f32 mask temporary.
        gt = x > t
        thresholded = jnp.where(gt, x, 0.0)
        mask_ref[...] = gt.astype(mask_ref.dtype)

    if seg_count > 1:
        # Lane-packed layout: each tile row holds `seg_count` original rows.
        # Per-segment sums (broadcast across each segment's lanes) via the
        # hoisted block-diagonal matrix on the otherwise-idle MXU.
        sums = jnp.dot(thresholded, segmat_ref[...],
                       preferred_element_type=jnp.float32,
                       precision=mxu_precision)             # (T, W)
    else:
        sums = jnp.sum(thresholded, axis=-1, keepdims=True)  # (T, 1)

    # row_sums[row_sums == 0] = 1.0
    sums = jnp.where(sums == 0.0, 1.0, sums)

    # EUP reciprocal + one Newton step: divide stays off the VALU, ~f32 exact.
    inv = pl.reciprocal(sums, approx=True)
    inv = inv * (2.0 - sums * inv)

    norm_ref[...] = (thresholded * inv).astype(norm_ref.dtype)


def threshold_attention(attention_weights, threshold, *, training=False,
                        mask_dtype=None):
    """Pallas implementation of ThresholdAttention.forward.

    Returns (normalized, mask). `mask_dtype` defaults to the input dtype to
    match the module; eval-mode callers that only need a gate can pass
    jnp.int8 to cut HBM write traffic ~25% (biggest relative win on v5e).
    """
    orig_shape = attention_weights.shape
    dtype = attention_weights.dtype
    mask_dtype = dtype if mask_dtype is None else jnp.dtype(mask_dtype)
    S = orig_shape[-1]
    x2d = attention_weights.reshape(-1, S)
    R0 = x2d.shape[0]

    # Lane packing: fold k rows into the lane axis whenever W = lcm(S, 128)
    # is small enough, so every load/store is lane-dense (biggest lever).
    g = math.gcd(S, 128)
    W = S * (128 // g)                        # lcm(S, 128)
    if W != S and W <= 512:
        k = W // S
    else:
        k, W = 1, S

    itemsize = jnp.dtype(dtype).itemsize
    sublane = max(8, 32 // max(1, itemsize))  # 8 (f32), 16 (bf16), 32 (i8)
    num_rows = _cdiv(R0, k)                   # packed rows
    total_rows = num_rows * k

    if total_rows != R0:
        # Pad ONLY to a multiple of k (at most k-1 zero rows).  Zero rows are
        # harmless: all ops are row-local, their sums hit the ==0 guard, and
        # the rows are sliced off below.
        x2d = jnp.pad(x2d, ((0, total_rows - R0), (0, 0)))
    x_packed = x2d.reshape(num_rows, W)

    vmem_bytes, vmem_limit = _vmem_params()
    tile_rows = _choose_tile_rows(num_rows, W, itemsize, sublane, vmem_bytes)
    # Ragged last block: out-of-range rows read garbage; every op is strictly
    # row-local, so that garbage (possibly inf/nan) never leaks into valid
    # rows, and Pallas drops the out-of-range stores.
    grid = (_cdiv(num_rows, tile_rows),)

    # Learnable threshold stays float32 in SMEM regardless of I/O dtype.
    thr = jnp.reshape(jnp.asarray(threshold, dtype=jnp.float32), (1,))
    mxu_precision = (jax.lax.Precision.HIGHEST if dtype == jnp.float32
                     else jax.lax.Precision.DEFAULT)

    kernel = functools.partial(_threshold_attention_kernel, training=training,
                               seg_count=k, mxu_precision=mxu_precision)
    block_spec = pl.BlockSpec((tile_rows, W), lambda i: (i, 0))

    in_specs = [pl.BlockSpec(memory_space=pltpu.MemorySpace.SMEM),  # threshold
                block_spec]                                         # x
    inputs = [thr, x_packed]
    if k > 1:
        # Hoisted block-diagonal segment-sum matrix; same block every grid
        # step so it stays resident in VMEM.
        seg = jnp.arange(W, dtype=jnp.int32) // S
        seg_mat = (seg[:, None] == seg[None, :]).astype(jnp.float32)
        in_specs.append(pl.BlockSpec((W, W), lambda i: (0, 0)))
        inputs.append(seg_mat)

    normalized, mask = pl.pallas_call(
        kernel,
        grid=grid,
        in_specs=in_specs,
        out_specs=(block_spec, block_spec),
        out_shape=(
            jax.ShapeDtypeStruct((num_rows, W), dtype),
            jax.ShapeDtypeStruct((num_rows, W), mask_dtype),
        ),
        compiler_params=pltpu.CompilerParams(
            dimension_semantics=("parallel",),
            vmem_limit_bytes=vmem_limit,
        ),
    )(*inputs)

    normalized = normalized.reshape(total_rows, S)
    mask = mask.reshape(total_rows, S)
    if total_rows != R0:
        normalized = normalized[:R0]
        mask = mask[:R0]
    # TODO(synk): in training mode with bf16 I/O the stored mask is bf16,
    # diverging from the PyTorch module's float32 mask values.
    return normalized.reshape(orig_shape), mask.reshape(orig_shape)


def _reference(attention_weights, threshold, *, training=False):
    """Pure-JAX reference mirroring the PyTorch forward (f32 compute)."""
    x = attention_weights.astype(jnp.float32)
    if training:
        mask = jax.nn.sigmoid(20.0 * (x - threshold))
    else:
        mask = (x > threshold).astype(jnp.float32)
    thresholded = x * mask
    row_sums = jnp.sum(thresholded, axis=-1, keepdims=True)
    row_sums = jnp.where(row_sums == 0.0, 1.0, row_sums)
    return thresholded / row_sums, mask


if __name__ == "__main__":
    # Deterministic parameter init (matches nn.Parameter(torch.tensor(0.002))).
    init_threshold = jnp.float32(0.002)

    key = jax.random.PRNGKey(0)
    k1, k2 = jax.random.split(key)

    ok = True

    # --- batch=2, heads=4, seq=16: S=16 -> k=8, W=128, lane-dense. ---
    logits = jax.random.normal(k1, (2, 4, 16, 16), dtype=jnp.float32)
    attention_weights = jax.nn.softmax(logits, axis=-1)

    for training in (False, True):
        norm, mask = threshold_attention(attention_weights, init_threshold,
                                         training=training)
        norm = jax.block_until_ready(norm)
        mask = jax.block_until_ready(mask)
        norm_ref, mask_ref = _reference(attention_weights, init_threshold,
                                        training=training)
        ok &= bool(jnp.allclose(norm, norm_ref, atol=1e-4, rtol=1e-4))
        ok &= bool(jnp.allclose(mask, mask_ref, atol=1e-4, rtol=1e-4))

    # --- bfloat16 I/O (halves HBM traffic); kernel computes in f32. ---
    aw_bf16 = attention_weights.astype(jnp.bfloat16)
    norm, mask = threshold_attention(aw_bf16, init_threshold, training=False)
    norm = jax.block_until_ready(norm)
    mask = jax.block_until_ready(mask)
    norm_ref, mask_ref = _reference(aw_bf16, init_threshold, training=False)
    ok &= bool(jnp.allclose(norm.astype(jnp.float32), norm_ref,
                            atol=2e-2, rtol=2e-2))
    ok &= bool(jnp.allclose(mask.astype(jnp.float32), mask_ref,
                            atol=2e-2, rtol=2e-2))

    # --- S=24: generalized packing (W=384, k=16), pad-to-k, ragged block. ---
    logits2 = jax.random.normal(k2, (2, 3, 11, 24), dtype=jnp.float32)
    aw2 = jax.nn.softmax(logits2, axis=-1)
    norm, mask = threshold_attention(aw2, init_threshold, training=False)
    norm = jax.block_until_ready(norm)
    mask = jax.block_until_ready(mask)
    norm_ref, mask_ref = _reference(aw2, init_threshold, training=False)
    ok &= bool(jnp.allclose(norm, norm_ref, atol=1e-4, rtol=1e-4))
    ok &= bool(jnp.allclose(mask, mask_ref, atol=1e-4, rtol=1e-4))

    if ok:
        print("KERNEL_OK")
    else:
        print("KERNEL_MISMATCH")
</pallas_src>

<mosaic_0001>
module attributes {stable_mosaic.version = 11 : i64} {
  func.func @_threshold_attention_kernel(%arg0: i32, %arg1: memref<1xf32, #tpu.memory_space<smem>>, %arg2: memref<8x128xf32, #tpu.memory_space<vmem>>, %arg3: memref<128x128xf32, #tpu.memory_space<vmem>>, %arg4: memref<8x128xf32, #tpu.memory_space<vmem>>, %arg5: memref<8x128xf32, #tpu.memory_space<vmem>>) attributes {dimension_semantics = [#tpu.dimension_semantics<parallel>], iteration_bounds = array<i64: 2>, scalar_prefetch = 0 : i64, scratch_operands = 0 : i64, tpu.core_type = #tpu.core_type<tc>, window_params = [{transform_indices = @transform_0, window_bounds = array<i64: 1>}, {transform_indices = @transform_1, window_bounds = array<i64: 8, 128>}, {pipeline_mode = #tpu.pipeline_mode<synchronous>, transform_indices = @transform_2, window_bounds = array<i64: 128, 128>}, {transform_indices = @transform_3, window_bounds = array<i64: 8, 128>}, {transform_indices = @transform_4, window_bounds = array<i64: 8, 128>}]} {
    %c0 = arith.constant 0 : index
    %c0_0 = arith.constant 0 : index
    %0 = vector.load %arg2[%c0, %c0_0] : memref<8x128xf32, #tpu.memory_space<vmem>>, vector<8x128xf32>
    %c0_1 = arith.constant 0 : index
    %1 = memref.load %arg1[%c0_1] : memref<1xf32, #tpu.memory_space<smem>>
    %2 = vector.broadcast %1 : f32 to vector<8x128xf32>
    %3 = arith.cmpf ogt, %0, %2 : vector<8x128xf32>
    %cst = arith.constant 0.000000e+00 : f32
    %4 = vector.broadcast %cst : f32 to vector<8x128xf32>
    %5 = arith.select %3, %0, %4 : vector<8x128xi1>, vector<8x128xf32>
    %6 = arith.extui %3 : vector<8x128xi1> to vector<8x128xi32>
    %7 = arith.sitofp %6 : vector<8x128xi32> to vector<8x128xf32>
    %c0_2 = arith.constant 0 : index
    %c0_3 = arith.constant 0 : index
    %8 = vector.load %arg5[%c0_2, %c0_3] : memref<8x128xf32, #tpu.memory_space<vmem>>, vector<8x128xf32>
    tpu.vector_store %arg5[%c0_2, %c0_3], %7 {strides = array<i32>} : memref<8x128xf32, #tpu.memory_space<vmem>>, vector<8x128xf32>,
    %c0_4 = arith.constant 0 : index
    %c0_5 = arith.constant 0 : index
    %9 = vector.load %arg3[%c0_4, %c0_5] : memref<128x128xf32, #tpu.memory_space<vmem>>, vector<128x128xf32>
    %cst_6 = arith.constant dense<0.000000e+00> : vector<8x128xf32>
    %10 = tpu.matmul %5, %9, %cst_6 {dimension_numbers = #tpu.dot_dimension_numbers<[1], [0], [0], [1], [0, 0, 1, 1], [], []>, precision = #tpu.contract_precision<fp32>} : vector<8x128xf32>, vector<128x128xf32>, vector<8x128xf32> -> vector<8x128xf32>
    %cst_7 = arith.constant 0.000000e+00 : f32
    %11 = vector.broadcast %cst_7 : f32 to vector<8x128xf32>
    %12 = arith.cmpf oeq, %10, %11 : vector<8x128xf32>
    %cst_8 = arith.constant 1.000000e+00 : f32
    %13 = vector.broadcast %cst_8 : f32 to vector<8x128xf32>
    %14 = arith.select %12, %13, %10 : vector<8x128xi1>, vector<8x128xf32>
    %15 = tpu.reciprocal %14 {approx = true} : vector<8x128xf32> -> vector<8x128xf32>
    %16 = arith.mulf %14, %15 : vector<8x128xf32>
    %cst_9 = arith.constant 2.000000e+00 : f32
    %17 = vector.broadcast %cst_9 : f32 to vector<8x128xf32>
    %18 = arith.subf %17, %16 : vector<8x128xf32>
    %19 = arith.mulf %15, %18 : vector<8x128xf32>
    %20 = arith.mulf %5, %19 : vector<8x128xf32>
    %c0_10 = arith.constant 0 : index
    %c0_11 = arith.constant 0 : index
    %21 = vector.load %arg4[%c0_10, %c0_11] : memref<8x128xf32, #tpu.memory_space<vmem>>, vector<8x128xf32>
    tpu.vector_store %arg4[%c0_10, %c0_11], %20 {strides = array<i32>} : memref<8x128xf32, #tpu.memory_space<vmem>>, vector<8x128xf32>,
    return
  }
  func.func @transform_0(%arg0: i32) -> i32 {
    %c0_i32 = arith.constant 0 : i32
    %c0_i32_0 = arith.constant 0 : i32
    return %c0_i32 : i32
  }
  func.func @transform_1(%arg0: i32) -> (i32, i32) {
    %c0_i32 = arith.constant 0 : i32
    %c0_i32_0 = arith.constant 0 : i32
    return %arg0, %c0_i32 : i32, i32
  }
  func.func @transform_2(%arg0: i32) -> (i32, i32) {
    %c0_i32 = arith.constant 0 : i32
    %c0_i32_0 = arith.constant 0 : i32
    %c0_i32_1 = arith.constant 0 : i32
    return %c0_i32, %c0_i32_0 : i32, i32
  }
  func.func @transform_3(%arg0: i32) -> (i32, i32) {
    %c0_i32 = arith.constant 0 : i32
    %c0_i32_0 = arith.constant 0 : i32
    return %arg0, %c0_i32 : i32, i32
  }
  func.func @transform_4(%arg0: i32) -> (i32, i32) {
    %c0_i32 = arith.constant 0 : i32
    %c0_i32_0 = arith.constant 0 : i32
    return %arg0, %c0_i32 : i32, i32
  }
}

</mosaic_0001>

<llo_original>
// kernel: tpu_custom_call.1
$region0: #{tpu_custom_call.1}
  #allocation0 [shape = 'u32[]', space=smem, size = 0x4, offset = 0x4, fixed_abs, tag = 'smem constant byte address 0x4 - core index']
  #allocation1 [shape = 'u32[72,128]{1,0:T(1,128)}', space=vmem, size = 0x9000, scoped, tag = 'internal scratch']
  #allocation2 [shape = 'f32[1]{0:T(128)S(6)}', space=smem, size = 0x200, scoped, tag = 'scoped memory for tpu_custom_call.1']
  %s0 = inlined_call_operand.<no memory space> [shape: f32[1], index: 0, kind: input, shape index: {}]
  %s1 = inlined_call_operand.hbm [shape: f32[16,128], index: 1, kind: input, shape index: {}]
  %s2 = inlined_call_operand.hbm [shape: f32[128,128], index: 2, kind: input, shape index: {}]
  %s3 = inlined_call_operand.hbm [shape: f32[16,128], index: 3, kind: output, shape index: {0}]
  %s4 = inlined_call_operand.hbm [shape: f32[16,128], index: 4, kind: output, shape index: {1}]
  %5 = xla_tuple %s3, %s4
  %s6 = sld [smem:[#allocation0]]
  $region61: #{tpu_custom_call.1} parent=0
    _
  %s8 = ssub.s32 1, %s6
  %s9 = scalar_select 0, %s8, %s6
  %10 = sst [smem:[#allocation2]] %s0
  $region1: #{tpu_custom_call.1} parent=0
    #allocation3 [shape = 'u8[8192]{0}', space=vmem, size = 0x2000, scoped, tag = 'input window, operand 1']
    #allocation4 [shape = 's32[2]{0}', space=sflag, size = 0x8, scoped, tag = 'scoped memory for tpu_custom_call.1']
    #allocation5 [shape = 's32[2]{0}', space=sflag, size = 0x8, scoped, tag = 'scoped memory for tpu_custom_call.1']
    #allocation6 [shape = 'u8[65536]{0}', space=vmem, size = 0x10000, scoped, tag = 'input window, operand 2, single buffered']
    #allocation7 [shape = 's32[1]{0}', space=sflag, size = 0x4, scoped, tag = 'scoped memory for tpu_custom_call.1']
    #allocation8 [shape = 'u8[8192]{0}', space=vmem, size = 0x2000, scoped, tag = 'output window, operand 0']
    #allocation9 [shape = 'u8[8192]{0}', space=vmem, size = 0x2000, scoped, tag = 'output window, operand 1']
    #allocation10 [shape = 's32[2]{0}', space=sflag, size = 0x8, scoped, tag = 'scoped memory for tpu_custom_call.1']
    %11 = vsyncpa [#allocation4], 0
    %s12 = scalar_lea.sflag [#allocation4], 1
    %13 = vsyncpa %s12, 0
    %14 = vsyncpa [#allocation7], 0
    %15 = vsyncpa [#allocation5], 0
    %s16 = scalar_lea.sflag [#allocation5], 1
    %17 = vsyncpa %s16, 0
    %18 = vsyncpa [#allocation10], 0
    %s19 = scalar_lea.sflag [#allocation10], 1
    %20 = vsyncpa %s19, 0
    loop: start=0, step=1, limit=4
    $region2: #{tpu_custom_call.1} parent=1 // loop_pre_header
      _
    $region3: #{tpu_custom_call.1} parent=1 // loop_header
      %s22 = sphi 0, %s26
      %p23 = scmp.ge.s32.totalorder %s22, 4
      %s30 = sphi 0, %s30
      %s32 = sphi 0, %s30
      %s33 = sphi 0, %s32
      %s47 = sphi 0, %s33
      %s53 = sphi 0, %s55
      %s56 = sphi 0, %s53
      %s57 = sphi 0, %s56
      %s73 = sphi 0, %s57
      %s77 = sphi 0, %s77
      %s79 = sphi 0, %s77
      %s80 = sphi 0, %s79
      %s94 = sphi 0, %s80
      %s100 = sphi 0, %s102
      %s103 = sphi 0, %s100
      %s104 = sphi 0, %s103
      %s120 = sphi 0, %s104
      %s126 = sphi 0, %s128
      %s129 = sphi 0, %s126
      %s130 = sphi 0, %s129
      %s146 = sphi 0, %s130
    $region4: #{tpu_custom_call.1} parent=1 // loop_header_branch
      %25 = sbr.rel (%p23) target = $region8
    $region5: #{tpu_custom_call.1} parent=1 // loop_body
      %s27 = ssub.s32 %s22, 1
      %s28 = ssub.s32 %s22, 2
      %s29 = sadd.s32 %s22, 1
      %s31 = sadd.s32 %s30, 1
      %p34 = scmp.eq.s32.totalorder %s22, 1
      %p35 = scmp.ne.s32.totalorder %s30, %s32
      %p36 = scmp.eq.s32.totalorder %s22, 0
      %p37 = por %p35, %p36
      %p38 = scmp.ne.s32.totalorder %s30, %s32
      %p39 = scmp.eq.s32.totalorder %s27, 1
      %p40 = por %p38, %p39
      %p41 = scmp.ne.s32.totalorder %s32, %s33
      %p42 = scmp.eq.s32.totalorder %s27, 0
      %p43 = por %p41, %p42
      %p44 = scmp.ne.s32.totalorder %s32, %s33
      %p45 = scmp.eq.s32.totalorder %s28, 1
      %p46 = por %p44, %p45
      %p48 = scmp.ne.s32.totalorder %s33, %s47
      %p49 = scmp.eq.s32.totalorder %s28, 0
      %p50 = por %p48, %p49
      %s51 = ssub.s32 %s22, %s29
      %p52 = scmp.eq.s32.totalorder %s51, 0
      %s54 = sadd.s32 %s53, 1
      %s55 = scalar_select %p52, %s53, %s54
      %p58 = pneg %p52
      %p59 = scmp.eq.s32.totalorder %s22, 1
      %p60 = por %p58, %p59
      %p61 = scmp.ne.s32.totalorder %s53, %s56
      %p62 = scmp.eq.s32.totalorder %s22, 0
      %p63 = por %p61, %p62
      %p64 = scmp.ne.s32.totalorder %s53, %s56
      %p65 = scmp.eq.s32.totalorder %s27, 1
      %p66 = por %p64, %p65
      %p67 = scmp.ne.s32.totalorder %s56, %s57
      %p68 = scmp.eq.s32.totalorder %s27, 0
      %p69 = por %p67, %p68
      %p70 = scmp.ne.s32.totalorder %s56, %s57
      %p71 = scmp.eq.s32.totalorder %s28, 1
      %p72 = por %p70, %p71
      %p74 = scmp.ne.s32.totalorder %s57, %s73
      %p75 = scmp.eq.s32.totalorder %s28, 0
      %p76 = por %p74, %p75
      %s78 = sadd.s32 %s77, 1
      %p81 = scmp.eq.s32.totalorder %s22, 1
      %p82 = scmp.ne.s32.totalorder %s77, %s79
      %p83 = scmp.eq.s32.totalorder %s22, 0
      %p84 = por %p82, %p83
      %p85 = scmp.ne.s32.totalorder %s77, %s79
      %p86 = scmp.eq.s32.totalorder %s27, 1
      %p87 = por %p85, %p86
      %p88 = scmp.ne.s32.totalorder %s79, %s80
      %p89 = scmp.eq.s32.totalorder %s27, 0
      %p90 = por %p88, %p89
      %p91 = scmp.ne.s32.totalorder %s79, %s80
      %p92 = scmp.eq.s32.totalorder %s28, 1
      %p93 = por %p91, %p92
      %p95 = scmp.ne.s32.totalorder %s80, %s94
      %p96 = scmp.eq.s32.totalorder %s28, 0
      %p97 = por %p95, %p96
      %s98 = ssub.s32 %s22, %s29
      %p99 = scmp.eq.s32.totalorder %s98, 0
      %s101 = sadd.s32 %s100, 1
      %s102 = scalar_select %p99, %s100, %s101
      %p105 = pneg %p99
      %p106 = scmp.eq.s32.totalorder %s22, 1
      %p107 = por %p105, %p106
      %p108 = scmp.ne.s32.totalorder %s100, %s103
      %p109 = scmp.eq.s32.totalorder %s22, 0
      %p110 = por %p108, %p109
      %p111 = scmp.ne.s32.totalorder %s100, %s103
      %p112 = scmp.eq.s32.totalorder %s27, 1
      %p113 = por %p111, %p112
      %p114 = scmp.ne.s32.totalorder %s103, %s104
      %p115 = scmp.eq.s32.totalorder %s27, 0
      %p116 = por %p114, %p115
      %p117 = scmp.ne.s32.totalorder %s103, %s104
      %p118 = scmp.eq.s32.totalorder %s28, 1
      %p119 = por %p117, %p118
      %p121 = scmp.ne.s32.totalorder %s104, %s120
      %p122 = scmp.eq.s32.totalorder %s28, 0
      %p123 = por %p121, %p122
      %s124 = ssub.s32 %s22, %s29
      %p125 = scmp.eq.s32.totalorder %s124, 0
      %s127 = sadd.s32 %s126, 1
      %s128 = scalar_select %p125, %s126, %s127
      %p131 = pneg %p125
      %p132 = scmp.eq.s32.totalorder %s22, 1
      %p133 = por %p131, %p132
      %p134 = scmp.ne.s32.totalorder %s126, %s129
      %p135 = scmp.eq.s32.totalorder %s22, 0
      %p136 = por %p134, %p135
      %p137 = scmp.ne.s32.totalorder %s126, %s129
      %p138 = scmp.eq.s32.totalorder %s27, 1
      %p139 = por %p137, %p138
      %p140 = scmp.ne.s32.totalorder %s129, %s130
      %p141 = scmp.eq.s32.totalorder %s27, 0
      %p142 = por %p140, %p141
      %p143 = scmp.ne.s32.totalorder %s129, %s130
      %p144 = scmp.eq.s32.totalorder %s28, 1
      %p145 = por %p143, %p144
      %p147 = scmp.ne.s32.totalorder %s130, %s146
      %p148 = scmp.eq.s32.totalorder %s28, 0
      %p149 = por %p147, %p148
      %p150 = scmp.le.s32.totalorder 1, %s22
      %p151 = scmp.lt.s32.totalorder %s22, 3
      %p152 = pnand %p150, %p151
      %p153 = pneg %p152
      // Predicated region
      $region9: #{tpu_custom_call.1} parent=5 // pred_check
        _
      $region10: #{tpu_custom_call.1} parent=5 // pred_check_branch
        %155 = sbr.rel (%p152) target = $region12
      $region11: #{tpu_custom_call.1} parent=5 // pred_region
        %s156 = ssub.s32 %s22, 1
        // Predicated region
        $region13: #{tpu_custom_call.1} parent=11 // pred_check
          %p157 = pneg %p43
        $region14: #{tpu_custom_call.1} parent=11 // pred_check_branch
          %159 = sbr.rel (%p157) target = $region16
        $region15: #{tpu_custom_call.1} parent=11 // pred_region
          _
        $region16: #{tpu_custom_call.1} parent=11 // pred_fallthru
          _
        // Predicated region
        $region17: #{tpu_custom_call.1} parent=11 // pred_check
          %p160 = pneg %p90
        $region18: #{tpu_custom_call.1} parent=11 // pred_check_branch
          %162 = sbr.rel (%p160) target = $region20
        $region19: #{tpu_custom_call.1} parent=11 // pred_region
          %164 = vsyncadd [#allocation7], 0
          %s165 = sshll.u32 %s2, 4
          %s166 = int_to_ptr.hbm [resolvable:$true] %s165
          %s167 = sshll.u32 [#allocation6], 4
          %s168 = int_to_ptr.vmem [resolvable:$true] %s167
          %173 = dma.hbm_to_vmem [thread:$0]  %s166, 2048, %s168, [#allocation7], 128, 128, 8
        $region20: #{tpu_custom_call.1} parent=11 // pred_fallthru
          _
      $region12: #{tpu_custom_call.1} parent=5 // pred_fallthru
        _
      %p174 = scmp.lt.s32.totalorder %s22, 2
      // Predicated region
      $region21: #{tpu_custom_call.1} parent=5 // pred_check
        %p175 = pneg %p174
      $region22: #{tpu_custom_call.1} parent=5 // pred_check_branch
        %177 = sbr.rel (%p175) target = $region24
      $region23: #{tpu_custom_call.1} parent=5 // pred_region
        // Predicated region
        $region25: #{tpu_custom_call.1} parent=23 // pred_check
          %p178 = pneg %p63
        $region26: #{tpu_custom_call.1} parent=23 // pred_check_branch
          %180 = sbr.rel (%p178) target = $region28
        $region27: #{tpu_custom_call.1} parent=23 // pred_region
          %s181 = sand.u32 %s53, 1
          %s182 = scalar_lea.sflag [#allocation4], %s181
          %s183 = sand.u32 %s53, 1
          %s184 = smul.addr %s183, 8
          %s185 = scalar_lea.vmem [#allocation3], %s184
          %187 = vsyncadd %s182, 0
          %s188 = smul.addr %s22, 8
          %s189 = scalar_lea.hbm %s1, %s188
          %s191 = sshll.u32 %s189, 4
          %s192 = int_to_ptr.hbm [resolvable:$true] %s191
          %s193 = sshll.u32 %s185, 4
          %s194 = int_to_ptr.vmem [resolvable:$true] %s193
          %196 = dma.hbm_to_vmem [thread:$0]  %s192, 128, %s194, %s182
        $region28: #{tpu_custom_call.1} parent=23 // pred_fallthru
          _
      $region24: #{tpu_custom_call.1} parent=5 // pred_fallthru
        _
      %p197 = scmp.le.s32.totalorder 1, %s22
      %p198 = scmp.lt.s32.totalorder %s22, 3
      %p199 = pnand %p197, %p198
      %p200 = pneg %p199
      // Predicated region
      $region29: #{tpu_custom_call.1} parent=5 // pred_check
        _
      $region30: #{tpu_custom_call.1} parent=5 // pred_check_branch
        %202 = sbr.rel (%p199) target = $region32
      $region31: #{tpu_custom_call.1} parent=5 // pred_region
        %s203 = ssub.s32 %s22, 1
        %s204 = sand.u32 %s56, 1
        %s205 = scalar_lea.sflag [#allocation4], %s204
        %s206 = sand.u32 %s56, 1
        %s207 = smul.addr %s206, 8
        %s208 = scalar_lea.vmem [#allocation3], %s207
        // Predicated region
        $region33: #{tpu_custom_call.1} parent=31 // pred_check
          %p209 = pneg %p69
        $region34: #{tpu_custom_call.1} parent=31 // pred_check_branch
          %211 = sbr.rel (%p209) target = $region36
        $region35: #{tpu_custom_call.1} parent=31 // pred_region
          %213 = dma.done %s205, 128
        $region36: #{tpu_custom_call.1} parent=31 // pred_fallthru
          _
        // Predicated region
        $region37: #{tpu_custom_call.1} parent=31 // pred_check
          %p214 = pneg %p90
        $region38: #{tpu_custom_call.1} parent=31 // pred_check_branch
          %216 = sbr.rel (%p214) target = $region40
        $region39: #{tpu_custom_call.1} parent=31 // pred_region
          %218 = dma.done [#allocation7], 2048
        $region40: #{tpu_custom_call.1} parent=31 // pred_fallthru
          _
        %p219 = pneg %p43
        %p220 = pneg %p40
        %s221 = sand.u32 %s56, 1
        %s222 = scalar_lea.sflag [#allocation4], %s221
        %s223 = sand.u32 %s56, 1
        %s224 = smul.addr %s223, 8
        %s225 = scalar_lea.vmem [#allocation3], %s224
        %p226 = pneg %p69
        %p227 = pneg %p66
        %p228 = pneg %p90
        %p229 = pneg %p87
        %p230 = pneg %p116
        %p231 = pneg %p113
        %s232 = sand.u32 %s103, 1
        %s233 = scalar_lea.sflag [#allocation5], %s232
        %s234 = sand.u32 %s103, 1
        %s235 = smul.addr %s234, 8
        %s236 = scalar_lea.vmem [#allocation8], %s235
        %p237 = pneg %p142
        %p238 = pneg %p139
        %s239 = sand.u32 %s129, 1
        %s240 = scalar_lea.sflag [#allocation10], %s239
        %s241 = sand.u32 %s129, 1
        %s242 = smul.addr %s241, 8
        %s243 = scalar_lea.vmem [#allocation9], %s242
        %v244 = vld [vmem:[%s208] sm:$0xff]
        %s245 = sld [smem:[#allocation2]]
        %v246 = vstv %s245
        %vm247 = vcmp.gt.f32.partialorder %v244, %v246
        %v248 = vsel %vm247, %v244, 0.0
        %v249 = vsel %vm247, 1, 0
        %v250 = vcvt.s32.f32 %v249
        %251 = vst [vmem:[%s243] sm:$0xff] %v250
        %v252 = vld [vmem:[#allocation6] sm:$0xff]
        %v253 = vld [vmem:[#allocation6 + $0x8] sm:$0xff]
        %v254 = vld [vmem:[#allocation6 + $0x10] sm:$0xff]
        %v255 = vld [vmem:[#allocation6 + $0x18] sm:$0xff]
        %v256 = vld [vmem:[#allocation6 + $0x20] sm:$0xff]
        %v257 = vld [vmem:[#allocation6 + $0x28] sm:$0xff]
        %v258 = vld [vmem:[#allocation6 + $0x30] sm:$0xff]
        %v259 = vld [vmem:[#allocation6 + $0x38] sm:$0xff]
        %v260 = vld [vmem:[#allocation6 + $0x40] sm:$0xff]
        %v261 = vld [vmem:[#allocation6 + $0x48] sm:$0xff]
        %v262 = vld [vmem:[#allocation6 + $0x50] sm:$0xff]
        %v263 = vld [vmem:[#allocation6 + $0x58] sm:$0xff]
        %v264 = vld [vmem:[#allocation6 + $0x60] sm:$0xff]
        %v265 = vld [vmem:[#allocation6 + $0x68] sm:$0xff]
        %v266 = vld [vmem:[#allocation6 + $0x70] sm:$0xff]
        %v267 = vld [vmem:[#allocation6 + $0x78] sm:$0xff]
        %v268 = vand.u32 %v267, 4294901760
        %269 = vmatpush.msra.mxu0 %v268
        %v270 = vand.u32 %v266, 4294901760
        %271 = vmatpush.msra.mxu0 %v270
        %v272 = vand.u32 %v265, 4294901760
        %273 = vmatpush.msra.mxu0 %v272
        %v274 = vand.u32 %v264, 4294901760
        %275 = vmatpush.msra.mxu0 %v274
        %v276 = vand.u32 %v263, 4294901760
        %277 = vmatpush.msra.mxu0 %v276
        %v278 = vand.u32 %v262, 4294901760
        %279 = vmatpush.msra.mxu0 %v278
        %v280 = vand.u32 %v261, 4294901760
        %281 = vmatpush.msra.mxu0 %v280
        %v282 = vand.u32 %v260, 4294901760
        %283 = vmatpush.msra.mxu0 %v282
        %v284 = vand.u32 %v259, 4294901760
        %285 = vmatpush.msra.mxu0 %v284
        %v286 = vand.u32 %v258, 4294901760
        %287 = vmatpush.msra.mxu0 %v286
        %v288 = vand.u32 %v257, 4294901760
        %289 = vmatpush.msra.mxu0 %v288
        %v290 = vand.u32 %v256, 4294901760
        %291 = vmatpush.msra.mxu0 %v290
        %v292 = vand.u32 %v255, 4294901760
        %293 = vmatpush.msra.mxu0 %v292
        %v294 = vand.u32 %v254, 4294901760
        %295 = vmatpush.msra.mxu0 %v294
        %v296 = vand.u32 %v253, 4294901760
        %297 = vmatpush.msra.mxu0 %v296
        %v298 = vand.u32 %v252, 4294901760
        %299 = vmatpush.msra.mxu0 %v298
        %v300 = vand.u32 %v248, 4294901760
        %v301 = vsub.f32 %v248, %v300
        %v302 = vand.u32 %v301, 4294901760
        %v303 = vsub.f32 %v301, %v302
        %v304 = vand.u32 %v303, 4294901760
        %305 = vmatmul.f32.gmra.mxu0 %v304
        %v306 = vpop.f32.mrf.mxu0
        %v307 = vadd.f32 0.0, %v306
        %308 = vdwg.mxu0
        %v309 = vand.u32 %v267, 4294901760
        %v310 = vsub.f32 %v267, %v309
        %v311 = vand.u32 %v310, 4294901760
        %v312 = vsub.f32 %v310, %v311
        %v313 = vand.u32 %v312, 4294901760
        %314 = vmatpush.msra.mxu0 %v313
        %v315 = vand.u32 %v266, 4294901760
        %v316 = vsub.f32 %v266, %v315
        %v317 = vand.u32 %v316, 4294901760
        %v318 = vsub.f32 %v316, %v317
        %v319 = vand.u32 %v318, 4294901760
        %320 = vmatpush.msra.mxu0 %v319
        %v321 = vand.u32 %v265, 4294901760
        %v322 = vsub.f32 %v265, %v321
        %v323 = vand.u32 %v322, 4294901760
        %v324 = vsub.f32 %v322, %v323
        %v325 = vand.u32 %v324, 4294901760
        %326 = vmatpush.msra.mxu0 %v325
        %v327 = vand.u32 %v264, 4294901760
        %v328 = vsub.f32 %v264, %v327
        %v329 = vand.u32 %v328, 4294901760
        %v330 = vsub.f32 %v328, %v329
        %v331 = vand.u32 %v330, 4294901760
        %332 = vmatpush.msra.mxu0 %v331
        %v333 = vand.u32 %v263, 4294901760
        %v334 = vsub.f32 %v263, %v333
        %v335 = vand.u32 %v334, 4294901760
        %v336 = vsub.f32 %v334, %v335
        %v337 = vand.u32 %v336, 4294901760
        %338 = vmatpush.msra.mxu0 %v337
        %v339 = vand.u32 %v262, 4294901760
        %v340 = vsub.f32 %v262, %v339
        %v341 = vand.u32 %v340, 4294901760
        %v342 = vsub.f32 %v340, %v341
        %v343 = vand.u32 %v342, 4294901760
        %344 = vmatpush.msra.mxu0 %v343
        %v345 = vand.u32 %v261, 4294901760
        %v346 = vsub.f32 %v261, %v345
        %v347 = vand.u32 %v346, 4294901760
        %v348 = vsub.f32 %v346, %v347
        %v349 = vand.u32 %v348, 4294901760
        %350 = vmatpush.msra.mxu0 %v349
        %v351 = vand.u32 %v260, 4294901760
        %v352 = vsub.f32 %v260, %v351
        %v353 = vand.u32 %v352, 4294901760
        %v354 = vsub.f32 %v352, %v353
        %v355 = vand.u32 %v354, 4294901760
        %356 = vmatpush.msra.mxu0 %v355
        %v357 = vand.u32 %v259, 4294901760
        %v358 = vsub.f32 %v259, %v357
        %v359 = vand.u32 %v358, 4294901760
        %v360 = vsub.f32 %v358, %v359
        %v361 = vand.u32 %v360, 4294901760
        %362 = vmatpush.msra.mxu0 %v361
        %v363 = vand.u32 %v258, 4294901760
        %v364 = vsub.f32 %v258, %v363
        %v365 = vand.u32 %v364, 4294901760
        %v366 = vsub.f32 %v364, %v365
        %v367 = vand.u32 %v366, 4294901760
        %368 = vmatpush.msra.mxu0 %v367
        %v369 = vand.u32 %v257, 4294901760
        %v370 = vsub.f32 %v257, %v369
        %v371 = vand.u32 %v370, 4294901760
        %v372 = vsub.f32 %v370, %v371
        %v373 = vand.u32 %v372, 4294901760
        %374 = vmatpush.msra.mxu0 %v373
        %v375 = vand.u32 %v256, 4294901760
        %v376 = vsub.f32 %v256, %v375
        %v377 = vand.u32 %v376, 4294901760
        %v378 = vsub.f32 %v376, %v377
        %v379 = vand.u32 %v378, 4294901760
        %380 = vmatpush.msra.mxu0 %v379
        %v381 = vand.u32 %v255, 4294901760
        %v382 = vsub.f32 %v255, %v381
        %v383 = vand.u32 %v382, 4294901760
        %v384 = vsub.f32 %v382, %v383
        %v385 = vand.u32 %v384, 4294901760
        %386 = vmatpush.msra.mxu0 %v385
        %v387 = vand.u32 %v254, 4294901760
        %v388 = vsub.f32 %v254, %v387
        %v389 = vand.u32 %v388, 4294901760
        %v390 = vsub.f32 %v388, %v389
        %v391 = vand.u32 %v390, 4294901760
        %392 = vmatpush.msra.mxu0 %v391
        %v393 = vand.u32 %v253, 4294901760
        %v394 = vsub.f32 %v253, %v393
        %v395 = vand.u32 %v394, 4294901760
        %v396 = vsub.f32 %v394, %v395
        %v397 = vand.u32 %v396, 4294901760
        %398 = vmatpush.msra.mxu0 %v397
        %v399 = vand.u32 %v252, 4294901760
        %v400 = vsub.f32 %v252, %v399
        %v401 = vand.u32 %v400, 4294901760
        %v402 = vsub.f32 %v400, %v401
        %v403 = vand.u32 %v402, 4294901760
        %404 = vmatpush.msra.mxu0 %v403
        %v405 = vand.u32 %v248, 4294901760
        %406 = vmatmul.f32.gmra.mxu0 %v405
        %v407 = vpop.f32.mrf.mxu0
        %v408 = vadd.f32 %v307, %v407
        %409 = vdwg.mxu0
        %v410 = vand.u32 %v267, 4294901760
        %v411 = vsub.f32 %v267, %v410
        %412 = vmatpush.msra.mxu0 %v411
        %v413 = vand.u32 %v266, 4294901760
        %v414 = vsub.f32 %v266, %v413
        %415 = vmatpush.msra.mxu0 %v414
        %v416 = vand.u32 %v265, 4294901760
        %v417 = vsub.f32 %v265, %v416
        %418 = vmatpush.msra.mxu0 %v417
        %v419 = vand.u32 %v264, 4294901760
        %v420 = vsub.f32 %v264, %v419
        %421 = vmatpush.msra.mxu0 %v420
        %v422 = vand.u32 %v263, 4294901760
        %v423 = vsub.f32 %v263, %v422
        %424 = vmatpush.msra.mxu0 %v423
        %v425 = vand.u32 %v262, 4294901760
        %v426 = vsub.f32 %v262, %v425
        %427 = vmatpush.msra.mxu0 %v426
        %v428 = vand.u32 %v261, 4294901760
        %v429 = vsub.f32 %v261, %v428
        %430 = vmatpush.msra.mxu0 %v429
        %v431 = vand.u32 %v260, 4294901760
        %v432 = vsub.f32 %v260, %v431
        %433 = vmatpush.msra.mxu0 %v432
        %v434 = vand.u32 %v259, 4294901760
        %v435 = vsub.f32 %v259, %v434
        %436 = vmatpush.msra.mxu0 %v435
        %v437 = vand.u32 %v258, 4294901760
        %v438 = vsub.f32 %v258, %v437
        %439 = vmatpush.msra.mxu0 %v438
        %v440 = vand.u32 %v257, 4294901760
        %v441 = vsub.f32 %v257, %v440
        %442 = vmatpush.msra.mxu0 %v441
        %v443 = vand.u32 %v256, 4294901760
        %v444 = vsub.f32 %v256, %v443
        %445 = vmatpush.msra.mxu0 %v444
        %v446 = vand.u32 %v255, 4294901760
        %v447 = vsub.f32 %v255, %v446
        %448 = vmatpush.msra.mxu0 %v447
        %v449 = vand.u32 %v254, 4294901760
        %v450 = vsub.f32 %v254, %v449
        %451 = vmatpush.msra.mxu0 %v450
        %v452 = vand.u32 %v253, 4294901760
        %v453 = vsub.f32 %v253, %v452
        %454 = vmatpush.msra.mxu0 %v453
        %v455 = vand.u32 %v252, 4294901760
        %v456 = vsub.f32 %v252, %v455
        %457 = vmatpush.msra.mxu0 %v456
        %v458 = vand.u32 %v248, 4294901760
        %v459 = vsub.f32 %v248, %v458
        %460 = vmatmul.f32.gmra.mxu0 %v459
        %v461 = vpop.f32.mrf.mxu0
        %v462 = vadd.f32 %v408, %v461
        %463 = vdwg.mxu0
        %v464 = vand.u32 %v267, 4294901760
        %465 = vmatpush.msra.mxu0 %v464
        %v466 = vand.u32 %v266, 4294901760
        %467 = vmatpush.msra.mxu0 %v466
        %v468 = vand.u32 %v265, 4294901760
        %469 = vmatpush.msra.mxu0 %v468
        %v470 = vand.u32 %v264, 4294901760
        %471 = vmatpush.msra.mxu0 %v470
        %v472 = vand.u32 %v263, 4294901760
        %473 = vmatpush.msra.mxu0 %v472
        %v474 = vand.u32 %v262, 4294901760
        %475 = vmatpush.msra.mxu0 %v474
        %v476 = vand.u32 %v261, 4294901760
        %477 = vmatpush.msra.mxu0 %v476
        %v478 = vand.u32 %v260, 4294901760
        %479 = vmatpush.msra.mxu0 %v478
        %v480 = vand.u32 %v259, 4294901760
        %481 = vmatpush.msra.mxu0 %v480
        %v482 = vand.u32 %v258, 4294901760
        %483 = vmatpush.msra.mxu0 %v482
        %v484 = vand.u32 %v257, 4294901760
        %485 = vmatpush.msra.mxu0 %v484
        %v486 = vand.u32 %v256, 4294901760
        %487 = vmatpush.msra.mxu0 %v486
        %v488 = vand.u32 %v255, 4294901760
        %489 = vmatpush.msra.mxu0 %v488
        %v490 = vand.u32 %v254, 4294901760
        %491 = vmatpush.msra.mxu0 %v490
        %v492 = vand.u32 %v253, 4294901760
        %493 = vmatpush.msra.mxu0 %v492
        %v494 = vand.u32 %v252, 4294901760
        %495 = vmatpush.msra.mxu0 %v494
        %v496 = vand.u32 %v248, 4294901760
        %v497 = vsub.f32 %v248, %v496
        %v498 = vand.u32 %v497, 4294901760
        %499 = vmatmul.f32.gmra.mxu0 %v498
        %v500 = vpop.f32.mrf.mxu0
        %v501 = vadd.f32 %v462, %v500
        %502 = vdwg.mxu0
        %v503 = vand.u32 %v267, 4294901760
        %v504 = vsub.f32 %v267, %v503
        %v505 = vand.u32 %v504, 4294901760
        %506 = vmatpush.msra.mxu0 %v505
        %v507 = vand.u32 %v266, 4294901760
        %v508 = vsub.f32 %v266, %v507
        %v509 = vand.u32 %v508, 4294901760
        %510 = vmatpush.msra.mxu0 %v509
        %v511 = vand.u32 %v265, 4294901760
        %v512 = vsub.f32 %v265, %v511
        %v513 = vand.u32 %v512, 4294901760
        %514 = vmatpush.msra.mxu0 %v513
        %v515 = vand.u32 %v264, 4294901760
        %v516 = vsub.f32 %v264, %v515
        %v517 = vand.u32 %v516, 4294901760
        %518 = vmatpush.msra.mxu0 %v517
        %v519 = vand.u32 %v263, 4294901760
        %v520 = vsub.f32 %v263, %v519
        %v521 = vand.u32 %v520, 4294901760
        %522 = vmatpush.msra.mxu0 %v521
        %v523 = vand.u32 %v262, 4294901760
        %v524 = vsub.f32 %v262, %v523
        %v525 = vand.u32 %v524, 4294901760
        %526 = vmatpush.msra.mxu0 %v525
        %v527 = vand.u32 %v261, 4294901760
        %v528 = vsub.f32 %v261, %v527
        %v529 = vand.u32 %v528, 4294901760
        %530 = vmatpush.msra.mxu0 %v529
        %v531 = vand.u32 %v260, 4294901760
        %v532 = vsub.f32 %v260, %v531
        %v533 = vand.u32 %v532, 4294901760
        %534 = vmatpush.msra.mxu0 %v533
        %v535 = vand.u32 %v259, 4294901760
        %v536 = vsub.f32 %v259, %v535
        %v537 = vand.u32 %v536, 4294901760
        %538 = vmatpush.msra.mxu0 %v537
        %v539 = vand.u32 %v258, 4294901760
        %v540 = vsub.f32 %v258, %v539
        %v541 = vand.u32 %v540, 4294901760
        %542 = vmatpush.msra.mxu0 %v541
        %v543 = vand.u32 %v257, 4294901760
        %v544 = vsub.f32 %v257, %v543
        %v545 = vand.u32 %v544, 4294901760
        %546 = vmatpush.msra.mxu0 %v545
        %v547 = vand.u32 %v256, 4294901760
        %v548 = vsub.f32 %v256, %v547
        %v549 = vand.u32 %v548, 4294901760
        %550 = vmatpush.msra.mxu0 %v549
        %v551 = vand.u32 %v255, 4294901760
        %v552 = vsub.f32 %v255, %v551
        %v553 = vand.u32 %v552, 4294901760
        %554 = vmatpush.msra.mxu0 %v553
        %v555 = vand.u32 %v254, 4294901760
        %v556 = vsub.f32 %v254, %v555
        %v557 = vand.u32 %v556, 4294901760
        %558 = vmatpush.msra.mxu0 %v557
        %v559 = vand.u32 %v253, 4294901760
        %v560 = vsub.f32 %v253, %v559
        %v561 = vand.u32 %v560, 4294901760
        %562 = vmatpush.msra.mxu0 %v561
        %v563 = vand.u32 %v252, 4294901760
        %v564 = vsub.f32 %v252, %v563
        %v565 = vand.u32 %v564, 4294901760
        %566 = vmatpush.msra.mxu0 %v565
        %v567 = vand.u32 %v248, 4294901760
        %568 = vmatmul.f32.gmra.mxu0 %v567
        %v569 = vpop.f32.mrf.mxu0
        %v570 = vadd.f32 %v501, %v569
        %571 = vdwg.mxu0
        %v572 = vand.u32 %v267, 4294901760
        %573 = vmatpush.msra.mxu0 %v572
        %v574 = vand.u32 %v266, 4294901760
        %575 = vmatpush.msra.mxu0 %v574
        %v576 = vand.u32 %v265, 4294901760
        %577 = vmatpush.msra.mxu0 %v576
        %v578 = vand.u32 %v264, 4294901760
        %579 = vmatpush.msra.mxu0 %v578
        %v580 = vand.u32 %v263, 4294901760
        %581 = vmatpush.msra.mxu0 %v580
        %v582 = vand.u32 %v262, 4294901760
        %583 = vmatpush.msra.mxu0 %v582
        %v584 = vand.u32 %v261, 4294901760
        %585 = vmatpush.msra.mxu0 %v584
        %v586 = vand.u32 %v260, 4294901760
        %587 = vmatpush.msra.mxu0 %v586
        %v588 = vand.u32 %v259, 4294901760
        %589 = vmatpush.msra.mxu0 %v588
        %v590 = vand.u32 %v258, 4294901760
        %591 = vmatpush.msra.mxu0 %v590
        %v592 = vand.u32 %v257, 4294901760
        %593 = vmatpush.msra.mxu0 %v592
        %v594 = vand.u32 %v256, 4294901760
        %595 = vmatpush.msra.mxu0 %v594
        %v596 = vand.u32 %v255, 4294901760
        %597 = vmatpush.msra.mxu0 %v596
        %v598 = vand.u32 %v254, 4294901760
        %599 = vmatpush.msra.mxu0 %v598
        %v600 = vand.u32 %v253, 4294901760
        %601 = vmatpush.msra.mxu0 %v600
        %v602 = vand.u32 %v252, 4294901760
        %603 = vmatpush.msra.mxu0 %v602
        %v604 = vand.u32 %v248, 4294901760
        %605 = vmatmul.f32.gmra.mxu0 %v604
        %v606 = vpop.f32.mrf.mxu0
        %v607 = vadd.f32 %v570, %v606
        %608 = vdwg.mxu0
        %vm609 = vcmp.eq.f32.partialorder %v607, 0.0
        %v610 = vsel %vm609, 1.0, %v607
        %v611 = vrcp.pop %v610
        %v612 = vmul.f32 %v610, %v611
        %v613 = vsub.f32 2.0, %v612
        %v614 = vmul.f32 %v611, %v613
        %v615 = vmul.f32 %v248, %v614
        %616 = vst [vmem:[%s236] sm:$0xff] %v615
        %s617 = sand.u32 %s103, 1
        %s618 = scalar_lea.sflag [#allocation5], %s617
        %s619 = sand.u32 %s103, 1
        %s620 = smul.addr %s619, 8
        %s621 = scalar_lea.vmem [#allocation8], %s620
        %s622 = sand.u32 %s129, 1
        %s623 = scalar_lea.sflag [#allocation10], %s622
        %s624 = sand.u32 %s129, 1
        %s625 = smul.addr %s624, 8
        %s626 = scalar_lea.vmem [#allocation9], %s625
        // Predicated region
        $region41: #{tpu_custom_call.1} parent=31 // pred_check
          %p627 = pneg %p113
        $region42: #{tpu_custom_call.1} parent=31 // pred_check_branch
          %629 = sbr.rel (%p627) target = $region44
        $region43: #{tpu_custom_call.1} parent=31 // pred_region
          %631 = vsyncadd %s618, 0
          %s632 = smul.addr %s27, 8
          %s633 = scalar_lea.hbm %s3, %s632
          %s635 = sshll.u32 %s621, 4
          %s636 = int_to_ptr.vmem [resolvable:$true] %s635
          %s637 = sshll.u32 %s633, 4
          %s638 = int_to_ptr.hbm [resolvable:$true] %s637
          %640 = dma.vmem_to_hbm [thread:$0]  %s636, 128, %s638, %s618
        $region44: #{tpu_custom_call.1} parent=31 // pred_fallthru
          _
        // Predicated region
        $region45: #{tpu_custom_call.1} parent=31 // pred_check
          %p641 = pneg %p139
        $region46: #{tpu_custom_call.1} parent=31 // pred_check_branch
          %643 = sbr.rel (%p641) target = $region48
        $region47: #{tpu_custom_call.1} parent=31 // pred_region
          %645 = vsyncadd %s623, 0
          %s646 = smul.addr %s27, 8
          %s647 = scalar_lea.hbm %s4, %s646
          %s649 = sshll.u32 %s626, 4
          %s650 = int_to_ptr.vmem [resolvable:$true] %s649
          %s651 = sshll.u32 %s647, 4
          %s652 = int_to_ptr.hbm [resolvable:$true] %s651
          %654 = dma.vmem_to_hbm [thread:$0]  %s650, 128, %s652, %s623
        $region48: #{tpu_custom_call.1} parent=31 // pred_fallthru
          _
      $region32: #{tpu_custom_call.1} parent=5 // pred_fallthru
        _
      %p655 = scmp.le.s32.totalorder 2, %s22
      // Predicated region
      $region49: #{tpu_custom_call.1} parent=5 // pred_check
        %p656 = pneg %p655
      $region50: #{tpu_custom_call.1} parent=5 // pred_check_branch
        %658 = sbr.rel (%p656) target = $region52
      $region51: #{tpu_custom_call.1} parent=5 // pred_region
        %s659 = ssub.s32 %s22, 2
        // Predicated region
        $region53: #{tpu_custom_call.1} parent=51 // pred_check
          %p660 = pneg %p119
        $region54: #{tpu_custom_call.1} parent=51 // pred_check_branch
          %662 = sbr.rel (%p660) target = $region56
        $region55: #{tpu_custom_call.1} parent=51 // pred_region
          %s663 = sand.u32 %s104, 1
          %s664 = scalar_lea.sflag [#allocation5], %s663
          %s665 = sand.u32 %s104, 1
          %s666 = smul.addr %s665, 8
          %s667 = scalar_lea.vmem [#allocation8], %s666
          %669 = dma.done %s664, 128
        $region56: #{tpu_custom_call.1} parent=51 // pred_fallthru
          _
        // Predicated region
        $region57: #{tpu_custom_call.1} parent=51 // pred_check
          %p670 = pneg %p145
        $region58: #{tpu_custom_call.1} parent=51 // pred_check_branch
          %672 = sbr.rel (%p670) target = $region60
        $region59: #{tpu_custom_call.1} parent=51 // pred_region
          %s673 = sand.u32 %s130, 1
          %s674 = scalar_lea.sflag [#allocation10], %s673
          %s675 = sand.u32 %s130, 1
          %s676 = smul.addr %s675, 8
          %s677 = scalar_lea.vmem [#allocation9], %s676
          %679 = dma.done %s674, 128
        $region60: #{tpu_custom_call.1} parent=51 // pred_fallthru
          _
      $region52: #{tpu_custom_call.1} parent=5 // pred_fallthru
        _
    $region6: #{tpu_custom_call.1} parent=1 // loop_footer
      %s26 = sadd.s32 1, %s22
    $region7: #{tpu_custom_call.1} parent=1 // loop_footer_branch
      %21 = sbr.rel target = $region3
    $region8: #{tpu_custom_call.1} parent=1 // loop_exit
      _
    %680 = vsyncpa [#allocation4], 1
    %s681 = scalar_lea.sflag [#allocation4], 1
    %682 = vsyncpa %s681, 1
    %683 = vsyncpa [#allocation7], 1
    %684 = vsyncpa [#allocation5], 1
    %s685 = scalar_lea.sflag [#allocation5], 1
    %686 = vsyncpa %s685, 1
    %687 = vsyncpa [#allocation10], 1
    %s688 = scalar_lea.sflag [#allocation10], 1
    %689 = vsyncpa %s688, 1

</llo_original>
